<compile_context>
chip_gen: v7x
topology: tpu7x:2x2x1
jax: 0.10.0
libtpu: 0.0.40
codegen_flags: <defaults>
</compile_context>

<pallas_src>
import jax
import jax.numpy as jnp
from jax.experimental import pallas as pl
from jax.experimental.pallas import tpu as pltpu

_LANE = 128
_BOXES_PER_ROW = _LANE // 4              # 32 boxes per 128-lane row
_MAX_BLOCK_ROWS = 2048                   # (2048, 128) f32 = 1 MiB per input block
_BOXES_PER_BLOCK = _BOXES_PER_ROW * _MAX_BLOCK_ROWS   # 65536 boxes / block


def _round_up(x, m):
    return (x + m - 1) // m * m


def _miou_loss_kernel(n_ref, o_ref, t_ref, psum_ref):
    """One lane-dense block: per-box (1 - IoU), masked, per-lane partial sums.

    o_ref/t_ref: (TR, 128) f32, xyxy coords interleaved along lanes
                 (lanes 4j..4j+3 hold box j's [x1, y1, x2, y2]).
    psum_ref:    (1, 128) f32 per-lane partial sums for this block.
    """
    i = pl.program_id(0)
    tr = o_ref.shape[0]

    o0 = o_ref[...]                       # x1 sits on lanes with lane % 4 == 0
    t0 = t_ref[...]
    # Lane swizzle on the XLU (idle in this VPU/HBM-bound kernel).  Positive
    # shifts 127/126/125 == -1/-2/-3 (mod 128) bring y1/x2/y2 onto each box's
    # base lane.  Circular-wrap lanes land on lane % 4 != 0 -> masked below.
    o1 = pltpu.roll(o0, 127, 1)           # y1
    o2 = pltpu.roll(o0, 126, 1)           # x2
    o3 = pltpu.roll(o0, 125, 1)           # y2
    t1 = pltpu.roll(t0, 127, 1)
    t2 = pltpu.roll(t0, 126, 1)
    t3 = pltpu.roll(t0, 125, 1)

    area_o = (o2 - o0) * (o3 - o1)
    area_t = (t2 - t0) * (t3 - t1)
    iw = jnp.maximum(jnp.minimum(o2, t2) - jnp.maximum(o0, t0), 0.0)
    ih = jnp.maximum(jnp.minimum(o3, t3) - jnp.maximum(o1, t1), 0.0)
    inter = iw * ih
    union = area_o + area_t - inter

    # Divide goes to the EUP (free bundle slot); exact divide is not needed
    # for the loss path.
    iou = inter * pl.reciprocal(union, approx=True)

    # Valid IoU lives only on base lanes (lane % 4 == 0) of real (unpadded)
    # boxes.  Garbage/NaN on other or padded lanes is select-masked away.
    n_boxes = n_ref[0]
    row = jax.lax.broadcasted_iota(jnp.int32, o0.shape, 0)
    lane = jax.lax.broadcasted_iota(jnp.int32, o0.shape, 1)
    g = (i * tr + row) * _LANE + lane      # global flat element index
    valid = jnp.logical_and((lane & 3) == 0, g < 4 * n_boxes)
    one_minus = jnp.where(valid, 1.0 - iou, 0.0)

    # Per-lane partial sums; the single cross-lane / cross-block reduction
    # and the exact divide by B happen outside the kernel.
    psum_ref[...] = jnp.sum(one_minus, axis=0, keepdims=True)


def _batched_miou_loss(output, target):
    """mean_i (1 - IoU(output[i], target[i])) for B > 1 via Pallas."""
    B = output.shape[0]

    # Lane-dense view with zero data movement when B is aligned:
    # (B, 4) -> (B*4,) -> (rows, 128) is a free contiguous reshape.
    if B <= _BOXES_PER_BLOCK:
        Bp = _round_up(B, 8 * _BOXES_PER_ROW)   # rows multiple of 8, single block
    else:
        Bp = _round_up(B, _BOXES_PER_BLOCK)     # whole number of grid blocks
    if Bp != B:
        # Single tail pad (only for unaligned B); zero-padded boxes are masked
        # inside the kernel using the n_boxes SMEM scalar.
        pad = ((0, Bp - B), (0, 0))
        output = jnp.pad(output, pad)
        target = jnp.pad(target, pad)

    rows = Bp // _BOXES_PER_ROW
    tr = min(rows, _MAX_BLOCK_ROWS)
    num_blocks = rows // tr
    o2 = output.reshape(rows, _LANE)
    t2 = target.reshape(rows, _LANE)

    # VMEM budget from actual block bytes (v7x has only ~32 MiB scoped VMEM):
    # 2 inputs x 2 pipeline buffers + headroom for elementwise intermediates.
    block_bytes = tr * _LANE * 4
    vmem_limit = min(30 * 1024 * 1024,
                     max(8 * 1024 * 1024, 20 * block_bytes + (2 << 20)))

    n_arr = jnp.array([B], dtype=jnp.int32)
    partials = pl.pallas_call(
        _miou_loss_kernel,
        out_shape=jax.ShapeDtypeStruct((1, num_blocks * _LANE), jnp.float32),
        grid_spec=pltpu.PrefetchScalarGridSpec(
            num_scalar_prefetch=1,
            grid=(num_blocks,),
            in_specs=[
                pl.BlockSpec((tr, _LANE), lambda i, n: (i, 0)),
                pl.BlockSpec((tr, _LANE), lambda i, n: (i, 0)),
            ],
            out_specs=pl.BlockSpec((1, _LANE), lambda i, n: (0, i)),
        ),
        compiler_params=pltpu.CompilerParams(
            # Blocks are independent -> both TensorCores usable on v7x.
            dimension_semantics=("parallel",),
            vmem_limit_bytes=vmem_limit,
        ),
    )(n_arr, o2, t2)

    # Tiny final reduction (num_blocks * 128 floats) + exact divide in XLA.
    return jnp.sum(partials) / B


def _box_iou_matrix(a, b):
    """torchvision-style box_iou: a (N,4), b (M,4) xyxy -> (N, M)."""
    area_a = (a[:, 2] - a[:, 0]) * (a[:, 3] - a[:, 1])
    area_b = (b[:, 2] - b[:, 0]) * (b[:, 3] - b[:, 1])
    lt = jnp.maximum(a[:, None, :2], b[None, :, :2])
    rb = jnp.minimum(a[:, None, 2:], b[None, :, 2:])
    wh = jnp.maximum(rb - lt, 0.0)
    inter = wh[..., 0] * wh[..., 1]
    return inter / (area_a[:, None] + area_b[None, :] - inter)


def miou(output, target):
    """JAX wrapper reproducing mIoU.forward(output, target)."""
    output = jnp.asarray(output, jnp.float32)
    target = jnp.asarray(target, jnp.float32)
    B = output.shape[0]

    if B == 1:
        # Per review: one box pair is pure launch overhead; plain jnp (fused
        # by XLA) beats a pallas_call round-trip.  Exact divide keeps parity.
        return _box_iou_matrix(output, target)

    return _batched_miou_loss(output, target)


if __name__ == "__main__":
    key = jax.random.PRNGKey(0)

    def make_boxes(k, n):
        k1, k2 = jax.random.split(k)
        xy1 = jax.random.uniform(k1, (n, 2), minval=0.0, maxval=8.0)
        wh = jax.random.uniform(k2, (n, 2), minval=1.0, maxval=8.0)
        return jnp.concatenate([xy1, xy1 + wh], axis=1)      # valid xyxy boxes

    def ref_iou_pairs(o, t):
        area_o = (o[:, 2] - o[:, 0]) * (o[:, 3] - o[:, 1])
        area_t = (t[:, 2] - t[:, 0]) * (t[:, 3] - t[:, 1])
        iw = jnp.maximum(jnp.minimum(o[:, 2], t[:, 2]) - jnp.maximum(o[:, 0], t[:, 0]), 0.0)
        ih = jnp.maximum(jnp.minimum(o[:, 3], t[:, 3]) - jnp.maximum(o[:, 1], t[:, 1]), 0.0)
        inter = iw * ih
        return inter / (area_o + area_t - inter)

    k1, k2, k3, k4 = jax.random.split(key, 4)

    # Batched path (B > 1): single-block Pallas kernel.
    B = 8
    out_b = make_boxes(k1, B)
    tgt_b = make_boxes(k2, B)
    loss = miou(out_b, tgt_b)
    jax.block_until_ready(loss)
    ref_loss = jnp.mean(1.0 - ref_iou_pairs(out_b, tgt_b))
    assert jnp.allclose(loss, ref_loss, rtol=1e-2, atol=1e-3), (loss, ref_loss)

    # Single-box path (B == 1): (1, 1) IoU matrix, exact divide.
    iou1 = miou(out_b[:1], tgt_b[:1])
    jax.block_until_ready(iou1)
    assert iou1.shape == (1, 1)
    ref_1 = ref_iou_pairs(out_b[:1], tgt_b[:1])[0]
    assert jnp.allclose(iou1[0, 0], ref_1, rtol=1e-5, atol=1e-6), (iou1, ref_1)

    # Gridded multi-block path: unaligned B exercises tail padding + masking.
    Bl = 2 * _BOXES_PER_BLOCK + 333
    out_l = make_boxes(k3, Bl)
    tgt_l = make_boxes(k4, Bl)
    loss_l = miou(out_l, tgt_l)
    jax.block_until_ready(loss_l)
    ref_l = jnp.mean(1.0 - ref_iou_pairs(out_l, tgt_l))
    assert jnp.allclose(loss_l, ref_l, rtol=1e-2, atol=1e-3), (loss_l, ref_l)

    print("KERNEL_OK")
</pallas_src>

<mosaic_0001>
module attributes {stable_mosaic.version = 11 : i64} {
  func.func @_miou_loss_kernel(%arg0: i32, %arg1: memref<1xi32, #tpu.memory_space<smem>>, %arg2: memref<8x128xf32, #tpu.memory_space<vmem>>, %arg3: memref<8x128xf32, #tpu.memory_space<vmem>>, %arg4: memref<1x128xf32, #tpu.memory_space<vmem>>) attributes {dimension_semantics = [#tpu.dimension_semantics<parallel>], iteration_bounds = array<i64: 1>, scalar_prefetch = 1 : i64, scratch_operands = 0 : i64, tpu.core_type = #tpu.core_type<tc>, window_params = [{transform_indices = @transform_0, window_bounds = array<i64: 8, 128>}, {transform_indices = @transform_1, window_bounds = array<i64: 8, 128>}, {transform_indices = @transform_2, window_bounds = array<i64: 1, 128>}]} {
    %c0 = arith.constant 0 : index
    %c0_0 = arith.constant 0 : index
    %0 = vector.load %arg2[%c0, %c0_0] : memref<8x128xf32, #tpu.memory_space<vmem>>, vector<8x128xf32>
    %c0_1 = arith.constant 0 : index
    %c0_2 = arith.constant 0 : index
    %1 = vector.load %arg3[%c0_1, %c0_2] : memref<8x128xf32, #tpu.memory_space<vmem>>, vector<8x128xf32>
    %c127_i32 = arith.constant 127 : i32
    %2 = tpu.dynamic_rotate %0 by %c127_i32 dim 1 : vector<8x128xf32>, i32 -> vector<8x128xf32>
    %c126_i32 = arith.constant 126 : i32
    %3 = tpu.dynamic_rotate %0 by %c126_i32 dim 1 : vector<8x128xf32>, i32 -> vector<8x128xf32>
    %c125_i32 = arith.constant 125 : i32
    %4 = tpu.dynamic_rotate %0 by %c125_i32 dim 1 : vector<8x128xf32>, i32 -> vector<8x128xf32>
    %c127_i32_3 = arith.constant 127 : i32
    %5 = tpu.dynamic_rotate %1 by %c127_i32_3 dim 1 : vector<8x128xf32>, i32 -> vector<8x128xf32>
    %c126_i32_4 = arith.constant 126 : i32
    %6 = tpu.dynamic_rotate %1 by %c126_i32_4 dim 1 : vector<8x128xf32>, i32 -> vector<8x128xf32>
    %c125_i32_5 = arith.constant 125 : i32
    %7 = tpu.dynamic_rotate %1 by %c125_i32_5 dim 1 : vector<8x128xf32>, i32 -> vector<8x128xf32>
    %8 = arith.subf %3, %0 : vector<8x128xf32>
    %9 = arith.subf %4, %2 : vector<8x128xf32>
    %10 = arith.mulf %8, %9 : vector<8x128xf32>
    %11 = arith.subf %6, %1 : vector<8x128xf32>
    %12 = arith.subf %7, %5 : vector<8x128xf32>
    %13 = arith.mulf %11, %12 : vector<8x128xf32>
    %14 = arith.minimumf %3, %6 : vector<8x128xf32>
    %15 = arith.maximumf %0, %1 : vector<8x128xf32>
    %16 = arith.subf %14, %15 : vector<8x128xf32>
    %cst = arith.constant 0.000000e+00 : f32
    %17 = vector.broadcast %cst : f32 to vector<8x128xf32>
    %18 = arith.maximumf %16, %17 : vector<8x128xf32>
    %19 = arith.minimumf %4, %7 : vector<8x128xf32>
    %20 = arith.maximumf %2, %5 : vector<8x128xf32>
    %21 = arith.subf %19, %20 : vector<8x128xf32>
    %cst_6 = arith.constant 0.000000e+00 : f32
    %22 = vector.broadcast %cst_6 : f32 to vector<8x128xf32>
    %23 = arith.maximumf %21, %22 : vector<8x128xf32>
    %24 = arith.mulf %18, %23 : vector<8x128xf32>
    %25 = arith.addf %10, %13 : vector<8x128xf32>
    %26 = arith.subf %25, %24 : vector<8x128xf32>
    %27 = tpu.reciprocal %26 {approx = true} : vector<8x128xf32> -> vector<8x128xf32>
    %28 = arith.mulf %24, %27 : vector<8x128xf32>
    %c0_7 = arith.constant 0 : index
    %29 = memref.load %arg1[%c0_7] : memref<1xi32, #tpu.memory_space<smem>>
    %30 = tpu.iota {dimensions = array<i32: 0>} : vector<8x128xi32>
    %31 = tpu.iota {dimensions = array<i32: 1>} : vector<8x128xi32>
    %c8_i32 = arith.constant 8 : i32
    %32 = arith.muli %arg0, %c8_i32 : i32
    %33 = vector.broadcast %32 : i32 to vector<8x128xi32>
    %34 = arith.addi %33, %30 : vector<8x128xi32>
    %c128_i32 = arith.constant 128 : i32
    %35 = vector.broadcast %c128_i32 : i32 to vector<8x128xi32>
    %36 = arith.muli %34, %35 : vector<8x128xi32>
    %37 = arith.addi %36, %31 : vector<8x128xi32>
    %c3_i32 = arith.constant 3 : i32
    %38 = vector.broadcast %c3_i32 : i32 to vector<8x128xi32>
    %39 = arith.andi %31, %38 : vector<8x128xi32>
    %c0_i32 = arith.constant 0 : i32
    %40 = vector.broadcast %c0_i32 : i32 to vector<8x128xi32>
    %41 = arith.cmpi eq, %39, %40 : vector<8x128xi32>
    %c4_i32 = arith.constant 4 : i32
    %42 = arith.muli %c4_i32, %29 : i32
    %43 = vector.broadcast %42 : i32 to vector<8x128xi32>
    %44 = arith.cmpi slt, %37, %43 : vector<8x128xi32>
    %45 = arith.andi %41, %44 : vector<8x128xi1>
    %cst_8 = arith.constant 1.000000e+00 : f32
    %46 = vector.broadcast %cst_8 : f32 to vector<8x128xf32>
    %47 = arith.subf %46, %28 : vector<8x128xf32>
    %cst_9 = arith.constant 0.000000e+00 : f32
    %48 = vector.broadcast %cst_9 : f32 to vector<8x128xf32>
    %49 = arith.select %45, %47, %48 : vector<8x128xi1>, vector<8x128xf32>
    %cst_10 = arith.constant dense<0.000000e+00> : vector<128xf32>
    %50 = vector.multi_reduction <add>, %49, %cst_10 [0] : vector<8x128xf32> to vector<128xf32>
    %51 = vector.shape_cast %50 : vector<128xf32> to vector<1x128xf32>
    %c0_11 = arith.constant 0 : index
    %c0_12 = arith.constant 0 : index
    %52 = vector.load %arg4[%c0_11, %c0_12] : memref<1x128xf32, #tpu.memory_space<vmem>>, vector<1x128xf32>
    tpu.vector_store %arg4[%c0_11, %c0_12], %51 {strides = array<i32>} : memref<1x128xf32, #tpu.memory_space<vmem>>, vector<1x128xf32>,
    return
  }
  func.func @transform_0(%arg0: i32, %arg1: memref<1xi32, #tpu.memory_space<smem>>) -> (i32, i32) {
    %c0_i32 = arith.constant 0 : i32
    %c0_i32_0 = arith.constant 0 : i32
    return %arg0, %c0_i32 : i32, i32
  }
  func.func @transform_1(%arg0: i32, %arg1: memref<1xi32, #tpu.memory_space<smem>>) -> (i32, i32) {
    %c0_i32 = arith.constant 0 : i32
    %c0_i32_0 = arith.constant 0 : i32
    return %arg0, %c0_i32 : i32, i32
  }
  func.func @transform_2(%arg0: i32, %arg1: memref<1xi32, #tpu.memory_space<smem>>) -> (i32, i32) {
    %c0_i32 = arith.constant 0 : i32
    %c0_i32_0 = arith.constant 0 : i32
    return %c0_i32, %arg0 : i32, i32
  }
}

</mosaic_0001>

<llo_original>
// kernel: tpu_custom_call.1
$region0: #{tpu_custom_call.1}
  #allocation0 [shape = 'u32[]', space=smem, size = 0x4, offset = 0x4, fixed_abs, tag = 'smem constant byte address 0x4 - core index']
  #allocation1 [shape = 'u32[144,128]{1,0:T(1,128)}', space=vmem, size = 0x12000, scoped, tag = 'internal scratch']
  #allocation2 [shape = 's32[1]{0}', space=sflag, size = 0x4, scoped, tag = 'scoped memory for tpu_custom_call.1']
  #allocation3 [shape = 's32[1]{0:T(128)S(6)}', space=smem, size = 0x200, scoped, tag = 'prefetched SMEM operand 0']
  %s0 = inlined_call_operand.<no memory space> [shape: s32[1], index: 0, kind: input, shape index: {}]
  %s1 = inlined_call_operand.hbm [shape: f32[8,128], index: 1, kind: input, shape index: {}]
  %s2 = inlined_call_operand.hbm [shape: f32[8,128], index: 2, kind: input, shape index: {}]
  %s3 = inlined_call_operand.hbm [shape: f32[1,128], index: 3, kind: output, shape index: {}]
  %s4 = sld [smem:[#allocation0]]
  $region26: #{tpu_custom_call.1} parent=0
    _
  %s6 = ssub.s32 1, %s4
  %s7 = scalar_select 0, %s6, %s4
  %8 = sst [smem:[#allocation3]] %s0
  $region1: #{tpu_custom_call.1} parent=0
    #allocation4 [shape = 'u8[4096]{0}', space=vmem, size = 0x1000, scoped, tag = 'input window, operand 1, single buffered']
    #allocation5 [shape = 's32[1]{0}', space=sflag, size = 0x4, scoped, tag = 'scoped memory for tpu_custom_call.1']
    #allocation6 [shape = 's32[1]{0}', space=sflag, size = 0x4, scoped, tag = 'scoped memory for tpu_custom_call.1']
    #allocation7 [shape = 'u8[4096]{0}', space=vmem, size = 0x1000, scoped, tag = 'input window, operand 2, single buffered']
    #allocation8 [shape = 's32[1]{0}', space=sflag, size = 0x4, scoped, tag = 'scoped memory for tpu_custom_call.1']
    #allocation9 [shape = 'u8[512]{0}', space=vmem, size = 0x400, scoped, tag = 'output window, operand 0, single buffered']
    %9 = vsyncpa [#allocation5], 0
    %10 = vsyncpa [#allocation8], 0
    %11 = vsyncpa [#allocation6], 0
    // Predicated region
    $region2: #{tpu_custom_call.1} parent=1 // pred_check
      _
    $region3: #{tpu_custom_call.1} parent=1 // pred_check_branch
      %13 = sbr.rel (0) target = $region5
    $region4: #{tpu_custom_call.1} parent=1 // pred_region
      %s15 = ssub.s32 128, 128
      %16 = vsyncadd [#allocation5], %s15
      %s18 = sshll.u32 [#allocation4], 4
      %s19 = int_to_ptr.vmem [resolvable:$true] %s18
      %21 = dma.hbm_to_vmem [thread:$0]  %s1, 128, %s19, [#allocation5]
    $region5: #{tpu_custom_call.1} parent=1 // pred_fallthru
      _
    // Predicated region
    $region6: #{tpu_custom_call.1} parent=1 // pred_check
      _
    $region7: #{tpu_custom_call.1} parent=1 // pred_check_branch
      %23 = sbr.rel (0) target = $region9
    $region8: #{tpu_custom_call.1} parent=1 // pred_region
      %s25 = ssub.s32 128, 128
      %26 = vsyncadd [#allocation8], %s25
      %s28 = sshll.u32 [#allocation7], 4
      %s29 = int_to_ptr.vmem [resolvable:$true] %s28
      %31 = dma.hbm_to_vmem [thread:$0]  %s2, 128, %s29, [#allocation8]
    $region9: #{tpu_custom_call.1} parent=1 // pred_fallthru
      _
    // Predicated region
    $region10: #{tpu_custom_call.1} parent=1 // pred_check
      _
    $region11: #{tpu_custom_call.1} parent=1 // pred_check_branch
      %33 = sbr.rel (0) target = $region13
    $region12: #{tpu_custom_call.1} parent=1 // pred_region
      %34 = dma.done [#allocation5], 128
    $region13: #{tpu_custom_call.1} parent=1 // pred_fallthru
      _
    // Predicated region
    $region14: #{tpu_custom_call.1} parent=1 // pred_check
      _
    $region15: #{tpu_custom_call.1} parent=1 // pred_check_branch
      %36 = sbr.rel (0) target = $region17
    $region16: #{tpu_custom_call.1} parent=1 // pred_region
      %37 = dma.done [#allocation8], 128
    $region17: #{tpu_custom_call.1} parent=1 // pred_fallthru
      _
    %v38 = vld [vmem:[#allocation4] sm:$0xff]
    %v39 = vld [vmem:[#allocation7] sm:$0xff]
    %40 = vrot.lane.b32.xlu0 %v38, 127
    %v41 = vpop.permute.xlu0 %40
    %42 = vrot.lane.b32.xlu0 %v38, 126
    %v43 = vpop.permute.xlu0 %42
    %44 = vrot.lane.b32.xlu0 %v38, 125
    %v45 = vpop.permute.xlu0 %44
    %46 = vrot.lane.b32.xlu0 %v39, 127
    %v47 = vpop.permute.xlu0 %46
    %48 = vrot.lane.b32.xlu0 %v39, 126
    %v49 = vpop.permute.xlu0 %48
    %50 = vrot.lane.b32.xlu0 %v39, 125
    %v51 = vpop.permute.xlu0 %50
    %v52 = vsub.f32 %v43, %v38
    %v53 = vsub.f32 %v45, %v41
    %v54 = vmul.f32 %v52, %v53
    %v55 = vsub.f32 %v49, %v39
    %v56 = vsub.f32 %v51, %v47
    %v57 = vmul.f32 %v55, %v56
    %v58 = vmin.f32 %v43, %v49
    %v59 = vmax.f32 %v38, %v39
    %v60 = vsub.f32 %v58, %v59
    %v61 = vmax.f32 %v60, 0.0
    %v62 = vmin.f32 %v45, %v51
    %v63 = vmax.f32 %v41, %v47
    %v64 = vsub.f32 %v62, %v63
    %v65 = vmax.f32 %v64, 0.0
    %v66 = vmul.f32 %v61, %v65
    %v67 = vadd.f32 %v54, %v57
    %v68 = vsub.f32 %v67, %v66
    %v69 = vrcp.pop %v68
    %v70 = vmul.f32 %v66, %v69
    %s71 = sld [smem:[#allocation3]]
    %v72 = vlaneseq
    %v73 = vshrl.u32 %v72, 7
    %v74 = vlaneseq
    %v75 = vand.u32 %v74, 127
    %s76 = smul.u32 0, 8
    %v77 = vstv %s76
    %v78 = vadd.s32 %v77, %v73
    %v79 = vmul.u32 %v78, 128
    %v80 = vadd.s32 %v79, %v75
    %v81 = vand.u32 %v75, 3
    %vm82 = vcmp.eq.s32.totalorder %v81, 0
    %s83 = smul.u32 %s71, 4
    %v84 = vstv %s83
    %vm85 = vcmp.lt.s32.totalorder %v80, %v84
    %vm86 = vmand %vm82, %vm85
    %v87 = vsub.f32 1.0, %v70
    %v88 = vsel %vm86, %v87, 0.0
    %v89 = vrot.slane %v88, 4
    %v90 = vadd.f32 %v88, %v89
    %v91 = vrot.slane %v90, 2
    %v92 = vadd.f32 %v90, %v91
    %v93 = vrot.slane %v92, 1
    %v94 = vadd.f32 %v92, %v93
    %95 = vst [vmem:[#allocation9] sm:$0x1] %v94
    // Predicated region
    $region18: #{tpu_custom_call.1} parent=1 // pred_check
      _
    $region19: #{tpu_custom_call.1} parent=1 // pred_check_branch
      %97 = sbr.rel (0) target = $region21
    $region20: #{tpu_custom_call.1} parent=1 // pred_region
      %s99 = ssub.s32 16, 16
      %100 = vsyncadd [#allocation6], %s99
      %s102 = sshll.u32 [#allocation9], 4
      %s103 = int_to_ptr.vmem [resolvable:$true] %s102
      %105 = dma.vmem_to_hbm [thread:$0]  %s103, 16, %s3, [#allocation6]
    $region21: #{tpu_custom_call.1} parent=1 // pred_fallthru
      _
    // Predicated region
    $region22: #{tpu_custom_call.1} parent=1 // pred_check
      _
    $region23: #{tpu_custom_call.1} parent=1 // pred_check_branch
      %107 = sbr.rel (0) target = $region25
    $region24: #{tpu_custom_call.1} parent=1 // pred_region
      %108 = dma.done [#allocation6], 16
    $region25: #{tpu_custom_call.1} parent=1 // pred_fallthru
      _
    %109 = vsyncpa [#allocation5], 1
    %110 = vsyncpa [#allocation8], 1
    %111 = vsyncpa [#allocation6], 1

</llo_original>
